<compile_context>
chip_gen: v5e
topology: v5e:2x2
jax: 0.10.0
libtpu: 0.0.40
codegen_flags: <defaults>
</compile_context>

<pallas_src>
import jax
import jax.numpy as jnp
from jax.experimental import pallas as pl
from jax.experimental.pallas import tpu as pltpu


def _round_up(x, m):
    return (x + m - 1) // m * m


def fade_delta_kernel(h_ref, dt_ref, w_ref, b_ref, o_ref):
    # gamma = delta_t @ W^T + b; with in_features == 1 this is just a
    # broadcasted outer product (TB,1)*(1,H)+(1,H) -> (TB,H), all in f32.
    gamma = dt_ref[...] * w_ref[...] + b_ref[...]
    # delta_h = exp(-relu(gamma)): one VPU max-with-scalar + one EUP exp.
    decay = jnp.exp(-jnp.maximum(gamma, 0.0))
    o_ref[...] = (h_ref[...].astype(jnp.float32) * decay).astype(o_ref.dtype)


def fade_delta(h, delta_t, weight, bias, *, batch_tile=None):
    """h: (B, H), delta_t: (B, 1), weight: (H, 1), bias: (H,) -> (B, H)."""
    B, H = h.shape
    out_dtype = h.dtype
    itemsize = jnp.dtype(out_dtype).itemsize

    # Lane-dense hidden axis.
    Hp = _round_up(H, 128)

    # Minimum sublane tile depends on packing (f32:8, bf16:16, int8/fp8:32).
    sublane = {4: 8, 2: 16, 1: 32}.get(itemsize, 8)

    if batch_tile is None:
        # Aim for ~4 MiB per h tile: big enough to amortize ~0.35 us/step grid
        # overhead, small enough that 2x(in)+2x(out) double-buffering fits the
        # scoped VMEM limit on every generation (incl. v7x's 64 MiB physical).
        rows = (4 << 20) // (Hp * itemsize)
        batch_tile = max(sublane, min(1024, rows))
    batch_tile = _round_up(batch_tile, sublane)
    batch_tile = min(batch_tile, _round_up(B, sublane))

    Bp = _round_up(B, batch_tile)

    # Pad operands. gamma inputs are kept/computed in f32 for accuracy even if
    # h is bf16 (no bf16 round-trip on gamma; matches the f32 reference).
    h_p = jnp.pad(h, ((0, Bp - B), (0, Hp - H)))
    dt_p = jnp.pad(delta_t.astype(jnp.float32), ((0, Bp - B), (0, 0)))
    w_p = jnp.pad(weight.reshape(1, H).astype(jnp.float32), ((0, 0), (0, Hp - H)))
    b_p = jnp.pad(bias.reshape(1, H).astype(jnp.float32), ((0, 0), (0, Hp - H)))

    grid = (Bp // batch_tile,)

    # VMEM budget: double-buffered h + out tiles, plus small dt/w/b buffers.
    tile_bytes = batch_tile * Hp * itemsize
    vmem_limit = int(min(4 * tile_bytes + (4 << 20), 64 << 20))

    # TODO(synk): if the caller guarantees h is dead after this op, add
    # input_output_aliases={0: 0} to save the output HBM allocation.
    out = pl.pallas_call(
        fade_delta_kernel,
        out_shape=jax.ShapeDtypeStruct((Bp, Hp), out_dtype),
        grid=grid,
        in_specs=[
            pl.BlockSpec((batch_tile, Hp), lambda i: (i, 0)),  # h   (tiled on batch)
            pl.BlockSpec((batch_tile, 1), lambda i: (i, 0)),   # delta_t (f32)
            pl.BlockSpec((1, Hp), lambda i: (0, 0)),           # weight, VMEM-resident
            pl.BlockSpec((1, Hp), lambda i: (0, 0)),           # bias,   VMEM-resident
        ],
        out_specs=pl.BlockSpec((batch_tile, Hp), lambda i: (i, 0)),
        compiler_params=pltpu.CompilerParams(
            dimension_semantics=("parallel",),  # shard batch tiles across TCs (v7x)
            vmem_limit_bytes=vmem_limit,
        ),
    )(h_p, dt_p, w_p, b_p)

    return out[:B, :H]


def fade_delta_ref(h, delta_t, weight, bias):
    gamma = delta_t @ weight.T + bias[None, :]
    return h * jnp.exp(-jnp.maximum(gamma, 0.0))


if __name__ == "__main__":
    batch, hidden = 8, 32

    key = jax.random.PRNGKey(0)
    k_h, k_dt, k_w, k_b = jax.random.split(key, 4)

    h = jax.random.normal(k_h, (batch, hidden), dtype=jnp.float32)
    # delta_t: non-negative time gaps, shape (batch, 1)
    delta_t = jnp.abs(jax.random.normal(k_dt, (batch, 1), dtype=jnp.float32))

    # nn.Linear(1, hidden): weight (hidden, 1), bias (hidden,)
    # PyTorch default init bound = 1/sqrt(in_features) = 1.0
    weight = jax.random.uniform(k_w, (hidden, 1), jnp.float32, -1.0, 1.0)
    bias = jax.random.uniform(k_b, (hidden,), jnp.float32, -1.0, 1.0)

    out = fade_delta(h, delta_t, weight, bias)
    out = jax.block_until_ready(out)

    ref = fade_delta_ref(h, delta_t, weight, bias)
    assert out.shape == (batch, hidden)
    assert jnp.allclose(out, ref, atol=1e-5, rtol=1e-5)

    print("KERNEL_OK")
</pallas_src>

<mosaic_0001>
module attributes {stable_mosaic.version = 11 : i64} {
  func.func @fade_delta_kernel(%arg0: i32, %arg1: memref<8x128xf32, #tpu.memory_space<vmem>>, %arg2: memref<8x1xf32, #tpu.memory_space<vmem>>, %arg3: memref<1x128xf32, #tpu.memory_space<vmem>>, %arg4: memref<1x128xf32, #tpu.memory_space<vmem>>, %arg5: memref<8x128xf32, #tpu.memory_space<vmem>>) attributes {dimension_semantics = [#tpu.dimension_semantics<parallel>], iteration_bounds = array<i64: 1>, scalar_prefetch = 0 : i64, scratch_operands = 0 : i64, tpu.core_type = #tpu.core_type<tc>, window_params = [{transform_indices = @transform_0, window_bounds = array<i64: 8, 128>}, {transform_indices = @transform_1, window_bounds = array<i64: 8, 1>}, {pipeline_mode = #tpu.pipeline_mode<synchronous>, transform_indices = @transform_2, window_bounds = array<i64: 1, 128>}, {pipeline_mode = #tpu.pipeline_mode<synchronous>, transform_indices = @transform_3, window_bounds = array<i64: 1, 128>}, {transform_indices = @transform_4, window_bounds = array<i64: 8, 128>}]} {
    %c0 = arith.constant 0 : index
    %c0_0 = arith.constant 0 : index
    %0 = vector.load %arg2[%c0, %c0_0] : memref<8x1xf32, #tpu.memory_space<vmem>>, vector<8x1xf32>
    %c0_1 = arith.constant 0 : index
    %c0_2 = arith.constant 0 : index
    %1 = vector.load %arg3[%c0_1, %c0_2] : memref<1x128xf32, #tpu.memory_space<vmem>>, vector<1x128xf32>
    %2 = vector.broadcast %0 : vector<8x1xf32> to vector<8x128xf32>
    %3 = vector.broadcast %1 : vector<1x128xf32> to vector<8x128xf32>
    %4 = arith.mulf %2, %3 : vector<8x128xf32>
    %c0_3 = arith.constant 0 : index
    %c0_4 = arith.constant 0 : index
    %5 = vector.load %arg4[%c0_3, %c0_4] : memref<1x128xf32, #tpu.memory_space<vmem>>, vector<1x128xf32>
    %6 = vector.broadcast %5 : vector<1x128xf32> to vector<8x128xf32>
    %7 = arith.addf %4, %6 : vector<8x128xf32>
    %cst = arith.constant 0.000000e+00 : f32
    %8 = vector.broadcast %cst : f32 to vector<8x128xf32>
    %9 = arith.maximumf %7, %8 : vector<8x128xf32>
    %cst_5 = arith.constant 0.000000e+00 : f32
    %10 = vector.broadcast %cst_5 : f32 to vector<8x128xf32>
    %11 = arith.subf %10, %9 : vector<8x128xf32>
    %12 = math.exp %11 : vector<8x128xf32>
    %c0_6 = arith.constant 0 : index
    %c0_7 = arith.constant 0 : index
    %13 = vector.load %arg1[%c0_6, %c0_7] : memref<8x128xf32, #tpu.memory_space<vmem>>, vector<8x128xf32>
    %14 = arith.mulf %13, %12 : vector<8x128xf32>
    %c0_8 = arith.constant 0 : index
    %c0_9 = arith.constant 0 : index
    %15 = vector.load %arg5[%c0_8, %c0_9] : memref<8x128xf32, #tpu.memory_space<vmem>>, vector<8x128xf32>
    tpu.vector_store %arg5[%c0_8, %c0_9], %14 {strides = array<i32>} : memref<8x128xf32, #tpu.memory_space<vmem>>, vector<8x128xf32>,
    return
  }
  func.func @transform_0(%arg0: i32) -> (i32, i32) {
    %c0_i32 = arith.constant 0 : i32
    %c0_i32_0 = arith.constant 0 : i32
    return %arg0, %c0_i32 : i32, i32
  }
  func.func @transform_1(%arg0: i32) -> (i32, i32) {
    %c0_i32 = arith.constant 0 : i32
    %c0_i32_0 = arith.constant 0 : i32
    return %arg0, %c0_i32 : i32, i32
  }
  func.func @transform_2(%arg0: i32) -> (i32, i32) {
    %c0_i32 = arith.constant 0 : i32
    %c0_i32_0 = arith.constant 0 : i32
    %c0_i32_1 = arith.constant 0 : i32
    return %c0_i32, %c0_i32_0 : i32, i32
  }
  func.func @transform_3(%arg0: i32) -> (i32, i32) {
    %c0_i32 = arith.constant 0 : i32
    %c0_i32_0 = arith.constant 0 : i32
    %c0_i32_1 = arith.constant 0 : i32
    return %c0_i32, %c0_i32_0 : i32, i32
  }
  func.func @transform_4(%arg0: i32) -> (i32, i32) {
    %c0_i32 = arith.constant 0 : i32
    %c0_i32_0 = arith.constant 0 : i32
    return %arg0, %c0_i32 : i32, i32
  }
}

</mosaic_0001>

<llo_original>
// kernel: tpu_custom_call.1
$region0: #{tpu_custom_call.1}
  #allocation0 [shape = 'u32[]', space=smem, size = 0x4, offset = 0x4, fixed_abs, tag = 'smem constant byte address 0x4 - core index']
  #allocation1 [shape = 'u32[72,128]{1,0:T(1,128)}', space=vmem, size = 0x9000, scoped, tag = 'internal scratch']
  %s0 = inlined_call_operand.vmem [shape: f32[8,128], index: 0, kind: input, shape index: {}]
  %s1 = inlined_call_operand.vmem [shape: f32[8,1], index: 1, kind: input, shape index: {}]
  %s2 = inlined_call_operand.vmem [shape: f32[1,128], index: 2, kind: input, shape index: {}]
  %s3 = inlined_call_operand.vmem [shape: f32[1,128], index: 3, kind: input, shape index: {}]
  %s4 = inlined_call_operand.hbm [shape: f32[8,128], index: 4, kind: output, shape index: {}]
  %s5 = sld [smem:[#allocation0]]
  $region26: #{tpu_custom_call.1} parent=0
    _
  %s7 = ssub.s32 1, %s5
  %s8 = scalar_select 0, %s7, %s5
  $region1: #{tpu_custom_call.1} parent=0
    #allocation2 [shape = 'u8[4096]{0}', space=vmem, size = 0x1000, scoped, tag = 'output window, operand 0, single buffered']
    #allocation3 [shape = 's32[1]{0}', space=sflag, size = 0x4, scoped, tag = 'scoped memory for tpu_custom_call.1']
    %9 = vsyncpa [#allocation3], 0
    // Predicated region
    $region2: #{tpu_custom_call.1} parent=1 // pred_check
      _
    $region3: #{tpu_custom_call.1} parent=1 // pred_check_branch
      %11 = sbr.rel (0) target = $region5
    $region4: #{tpu_custom_call.1} parent=1 // pred_region
      _
    $region5: #{tpu_custom_call.1} parent=1 // pred_fallthru
      _
    // Predicated region
    $region6: #{tpu_custom_call.1} parent=1 // pred_check
      _
    $region7: #{tpu_custom_call.1} parent=1 // pred_check_branch
      %13 = sbr.rel (0) target = $region9
    $region8: #{tpu_custom_call.1} parent=1 // pred_region
      _
    $region9: #{tpu_custom_call.1} parent=1 // pred_fallthru
      _
    // Predicated region
    $region10: #{tpu_custom_call.1} parent=1 // pred_check
      _
    $region11: #{tpu_custom_call.1} parent=1 // pred_check_branch
      %15 = sbr.rel (0) target = $region13
    $region12: #{tpu_custom_call.1} parent=1 // pred_region
      _
    $region13: #{tpu_custom_call.1} parent=1 // pred_fallthru
      _
    // Predicated region
    $region14: #{tpu_custom_call.1} parent=1 // pred_check
      _
    $region15: #{tpu_custom_call.1} parent=1 // pred_check_branch
      %17 = sbr.rel (0) target = $region17
    $region16: #{tpu_custom_call.1} parent=1 // pred_region
      _
    $region17: #{tpu_custom_call.1} parent=1 // pred_fallthru
      _
    %v18 = vld [vmem:[%s1] sm:$0xff]
    %v19 = vld [vmem:[%s2] sm:$0x1]
    %21 = vset.pattern.permute.xlu0 0
    %22 = vperm.xlu0 %21, %v18
    %v23 = vpop.permute.xlu0 %22
    %v26 = vperm.slane %v19, 0
    %v28 = vmul.f32 %v23, %v26
    %v29 = vld [vmem:[%s3] sm:$0x1]
    %v31 = vperm.slane %v29, 0
    %v33 = vadd.f32 %v28, %v31
    %v34 = vmax.f32 %v33, 0.0
    %v35 = vsub.f32 0.0, %v34
    %v36 = vmul.f32 %v35, 1.442695
    %v37 = vpow.pop %v36
    %v38 = vld [vmem:[%s0] sm:$0xff]
    %v39 = vmul.f32 %v38, %v37
    %40 = vst [vmem:[#allocation2] sm:$0xff] %v39
    // Predicated region
    $region18: #{tpu_custom_call.1} parent=1 // pred_check
      _
    $region19: #{tpu_custom_call.1} parent=1 // pred_check_branch
      %42 = sbr.rel (0) target = $region21
    $region20: #{tpu_custom_call.1} parent=1 // pred_region
      %44 = vsyncadd [#allocation3], 0
      %s46 = sshll.u32 [#allocation2], 4
      %s47 = int_to_ptr.vmem [resolvable:$true] %s46
      %s48 = sshll.u32 %s4, 4
      %s49 = int_to_ptr.hbm [resolvable:$true] %s48
      %51 = dma.vmem_to_hbm [thread:$0]  %s47, 128, %s49, [#allocation3]
    $region21: #{tpu_custom_call.1} parent=1 // pred_fallthru
      _
    // Predicated region
    $region22: #{tpu_custom_call.1} parent=1 // pred_check
      _
    $region23: #{tpu_custom_call.1} parent=1 // pred_check_branch
      %53 = sbr.rel (0) target = $region25
    $region24: #{tpu_custom_call.1} parent=1 // pred_region
      %55 = dma.done [#allocation3], 128
    $region25: #{tpu_custom_call.1} parent=1 // pred_fallthru
      _
    %56 = vsyncpa [#allocation3], 1

</llo_original>
